<compile_context>
chip_gen: v5e
topology: v5e:2x2
jax: 0.10.0
libtpu: 0.0.40
codegen_flags: <defaults>
</compile_context>

<pallas_src>
import functools

import jax
import jax.numpy as jnp
from jax.experimental import pallas as pl
from jax.experimental.pallas import tpu as pltpu

N = 8      # batch size in the demo
C = 13     # number of classes (hard-coded 13 in the PyTorch module)
K = 13     # rows of each per-instance class-weight matrix


def _ce_kernel(logits_ref, target_ref, cwf_ref, iw_ref, out_ref, *, c):
    # logits_ref: (TN, C)      target_ref: (TN, 1) i32
    # cwf_ref:    (TN, K*C)    iw_ref:     (TN, 1)
    # out_ref:    (1, 1) f32 in SMEM, resident across the grid (accumulator)

    x = logits_ref[...].astype(jnp.float32)                      # (TN, C)

    # Numerically stable log_softmax along the class dim.
    m = jnp.max(x, axis=1, keepdims=True)                        # (TN, 1)
    z = x - m
    lse = jnp.log(jnp.sum(jnp.exp(z), axis=1, keepdims=True))    # (TN, 1)
    logp = z - lse                                               # (TN, C)

    lab = target_ref[...]                                        # (TN, 1) i32

    # one_hot(target) as a lane mask via iota compare (scatter_ equivalent).
    col = jax.lax.broadcasted_iota(jnp.int32, logp.shape, 1)     # (TN, C)
    hit = col == lab                                             # (TN, C)
    # nll[n] = -logp[n, target[n]]
    nll = jnp.sum(jnp.where(hit, -logp, 0.0),
                  axis=1, keepdims=True)                         # (TN, 1)

    # In-kernel K-reduction fused with the target pick:
    #   picked_w[n] = sum_k cw[n, k, target[n]]
    # class_weights arrives flattened over (K, C); lane j corresponds to
    # class (j % C), so one masked cross-lane reduce does both the K-sum
    # and the one-hot select.
    cwf = cwf_ref[...].astype(jnp.float32)                       # (TN, K*C)
    colw = jax.lax.broadcasted_iota(jnp.int32, cwf.shape, 1)     # (TN, K*C)
    hitw = (colw % c) == lab                                     # (TN, K*C)
    picked_w = jnp.sum(jnp.where(hitw, cwf, 0.0),
                       axis=1, keepdims=True)                    # (TN, 1)

    iw = iw_ref[...].astype(jnp.float32)                         # (TN, 1)
    partial = jnp.sum(nll * picked_w * iw)                       # scalar f32

    @pl.when(pl.program_id(0) == 0)
    def _():
        out_ref[0, 0] = jnp.float32(0.0)

    out_ref[0, 0] += partial


def instance_class_weight_ce(logits, target, class_weights, instance_weights,
                             *, tn=512):
    """logits (N, C), target (N,), class_weights (N, K, C),
    instance_weights (N,)  ->  scalar f32 loss.

    Inputs are passed to the kernel in their native dtype; all accumulation
    is performed in f32 inside the kernel.
    """
    n, c = logits.shape
    k = class_weights.shape[1]

    # Row tile: multiple of 8 sublanes, large enough to amortize the
    # ~0.35 us per-grid-step overhead, clamped for small N.
    n_pad8 = pl.cdiv(n, 8) * 8
    tn = min(tn, n_pad8)
    n_pad = pl.cdiv(n, tn) * tn
    nb = n_pad // tn

    # Flatten class_weights over (K, C) -> lane-dense (N, K*C).  Contiguous
    # reshape, no data movement.  (Never ship a 3D (*, 13, 13) block: the
    # trailing (13, 13) would pad to (16, 128) in VMEM, ~12x bloat.)
    cwf = class_weights.reshape(n, k * c)
    tgt = target.reshape(n, 1)
    if tgt.dtype != jnp.int32:
        tgt = tgt.astype(jnp.int32)
    iw = instance_weights.reshape(n, 1)

    if n_pad != n:
        pad = n_pad - n
        logits = jnp.pad(logits, ((0, pad), (0, 0)))
        tgt = jnp.pad(tgt, ((0, pad), (0, 0)))     # padded targets = 0 (in range)
        cwf = jnp.pad(cwf, ((0, pad), (0, 0)))
        iw = jnp.pad(iw, ((0, pad), (0, 0)))       # padded iw = 0 -> contributes 0

    kernel = functools.partial(_ce_kernel, c=c)
    out = pl.pallas_call(
        kernel,
        grid=(nb,),
        out_shape=jax.ShapeDtypeStruct((1, 1), jnp.float32),
        in_specs=[
            pl.BlockSpec((tn, c), lambda i: (i, 0)),        # logits
            pl.BlockSpec((tn, 1), lambda i: (i, 0)),        # target
            pl.BlockSpec((tn, k * c), lambda i: (i, 0)),    # class_weights (flat)
            pl.BlockSpec((tn, 1), lambda i: (i, 0)),        # instance_weights
        ],
        out_specs=pl.BlockSpec(memory_space=pltpu.MemorySpace.SMEM),
        compiler_params=pltpu.CompilerParams(
            dimension_semantics=("arbitrary",),             # resident accumulator
            vmem_limit_bytes=32 * 1024 * 1024,
        ),
    )(logits, tgt, cwf, iw)
    # TODO(synk): on v7x (2 TensorCores) add a leading size-2 "parallel" grid
    # axis with per-core (2, 1) SMEM partials summed outside to use both cores.
    return out[0, 0]


def _reference(logits, target, class_weights, instance_weights):
    logp = jax.nn.log_softmax(logits.astype(jnp.float32), axis=1)
    y = jax.nn.one_hot(target, C, dtype=jnp.float32)
    t = -(y * logp)
    cmat = jnp.einsum('nkc,nc->nk', class_weights.astype(jnp.float32), t)
    return jnp.sum(jnp.sum(cmat, axis=1) * instance_weights.astype(jnp.float32))


if __name__ == "__main__":
    key = jax.random.PRNGKey(0)
    k1, k2, k3, k4 = jax.random.split(key, 4)

    logits = jax.random.normal(k1, (N, C), dtype=jnp.float32)
    target = jax.random.randint(k2, (N,), 0, C, dtype=jnp.int32)
    class_weights = jax.random.uniform(k3, (N, K, C), dtype=jnp.float32)
    instance_weights = jax.random.uniform(k4, (N,), dtype=jnp.float32)

    loss = instance_class_weight_ce(logits, target, class_weights,
                                    instance_weights)
    loss = jax.block_until_ready(loss)

    ref = _reference(logits, target, class_weights, instance_weights)
    assert jnp.allclose(loss, ref, rtol=1e-5, atol=1e-5), (loss, ref)

    print("KERNEL_OK")
</pallas_src>

<mosaic_0001>
module attributes {stable_mosaic.version = 11 : i64} {
  func.func @_ce_kernel(%arg0: i32, %arg1: memref<8x13xf32, #tpu.memory_space<vmem>>, %arg2: memref<8x1xi32, #tpu.memory_space<vmem>>, %arg3: memref<8x169xf32, #tpu.memory_space<vmem>>, %arg4: memref<8x1xf32, #tpu.memory_space<vmem>>, %arg5: memref<1x1xf32, #tpu.memory_space<smem>>) attributes {dimension_semantics = [#tpu.dimension_semantics<arbitrary>], iteration_bounds = array<i64: 1>, scalar_prefetch = 0 : i64, scratch_operands = 0 : i64, tpu.core_type = #tpu.core_type<tc>, window_params = [{transform_indices = @transform_0, window_bounds = array<i64: 8, 13>}, {transform_indices = @transform_1, window_bounds = array<i64: 8, 1>}, {transform_indices = @transform_2, window_bounds = array<i64: 8, 169>}, {transform_indices = @transform_3, window_bounds = array<i64: 8, 1>}, {transform_indices = @transform_4, window_bounds = array<i64: 1, 1>}]} {
    %c0 = arith.constant 0 : index
    %c0_0 = arith.constant 0 : index
    %0 = vector.load %arg1[%c0, %c0_0] : memref<8x13xf32, #tpu.memory_space<vmem>>, vector<8x13xf32>
    %cst = arith.constant dense<0xFF800000> : vector<8xf32>
    %1 = vector.multi_reduction <maximumf>, %0, %cst [1] : vector<8x13xf32> to vector<8xf32>
    %2 = vector.shape_cast %1 : vector<8xf32> to vector<8x1xf32>
    %3 = vector.broadcast %2 : vector<8x1xf32> to vector<8x13xf32>
    %4 = arith.subf %0, %3 : vector<8x13xf32>
    %5 = math.exp %4 : vector<8x13xf32>
    %cst_1 = arith.constant dense<0.000000e+00> : vector<8xf32>
    %6 = vector.multi_reduction <add>, %5, %cst_1 [1] : vector<8x13xf32> to vector<8xf32>
    %7 = vector.shape_cast %6 : vector<8xf32> to vector<8x1xf32>
    %8 = math.log %7 : vector<8x1xf32>
    %9 = vector.broadcast %8 : vector<8x1xf32> to vector<8x13xf32>
    %10 = arith.subf %4, %9 : vector<8x13xf32>
    %c0_2 = arith.constant 0 : index
    %c0_3 = arith.constant 0 : index
    %11 = vector.load %arg2[%c0_2, %c0_3] : memref<8x1xi32, #tpu.memory_space<vmem>>, vector<8x1xi32>
    %12 = tpu.iota {dimensions = array<i32: 1>} : vector<8x13xi32>
    %13 = vector.broadcast %11 : vector<8x1xi32> to vector<8x13xi32>
    %14 = arith.cmpi eq, %12, %13 : vector<8x13xi32>
    %cst_4 = arith.constant 0.000000e+00 : f32
    %15 = vector.broadcast %cst_4 : f32 to vector<8x13xf32>
    %16 = arith.subf %15, %10 : vector<8x13xf32>
    %cst_5 = arith.constant 0.000000e+00 : f32
    %17 = vector.broadcast %cst_5 : f32 to vector<8x13xf32>
    %18 = arith.select %14, %16, %17 : vector<8x13xi1>, vector<8x13xf32>
    %cst_6 = arith.constant dense<0.000000e+00> : vector<8xf32>
    %19 = vector.multi_reduction <add>, %18, %cst_6 [1] : vector<8x13xf32> to vector<8xf32>
    %20 = vector.shape_cast %19 : vector<8xf32> to vector<8x1xf32>
    %c0_7 = arith.constant 0 : index
    %c0_8 = arith.constant 0 : index
    %21 = vector.load %arg3[%c0_7, %c0_8] : memref<8x169xf32, #tpu.memory_space<vmem>>, vector<8x169xf32>
    %22 = tpu.iota {dimensions = array<i32: 1>} : vector<8x169xi32>
    %c13_i32 = arith.constant 13 : i32
    %c0_i32 = arith.constant 0 : i32
    %23 = arith.cmpi eq, %c13_i32, %c0_i32 : i32
    %c1_i32 = arith.constant 1 : i32
    %24 = arith.select %23, %c1_i32, %c13_i32 : i32
    %25 = vector.broadcast %24 : i32 to vector<8x169xi32>
    %26 = arith.remsi %22, %25 : vector<8x169xi32>
    %c0_i32_9 = arith.constant 0 : i32
    %27 = vector.broadcast %c0_i32_9 : i32 to vector<8x169xi32>
    %28 = arith.cmpi ne, %26, %27 : vector<8x169xi32>
    %c0_i32_10 = arith.constant 0 : i32
    %29 = vector.broadcast %c0_i32_10 : i32 to vector<8x169xi32>
    %30 = arith.cmpi slt, %26, %29 : vector<8x169xi32>
    %c0_i32_11 = arith.constant 0 : i32
    %31 = arith.cmpi slt, %24, %c0_i32_11 : i32
    %32 = vector.broadcast %31 : i1 to vector<8x169xi1>
    %33 = vector.broadcast %32 : vector<8x169xi1> to vector<8x169xi1>
    %34 = arith.xori %30, %33 : vector<8x169xi1>
    %35 = arith.andi %34, %28 : vector<8x169xi1>
    %36 = vector.broadcast %24 : i32 to vector<8x169xi32>
    %37 = arith.addi %26, %36 : vector<8x169xi32>
    %38 = arith.select %35, %37, %26 : vector<8x169xi1>, vector<8x169xi32>
    %39 = vector.broadcast %11 : vector<8x1xi32> to vector<8x169xi32>
    %40 = arith.cmpi eq, %38, %39 : vector<8x169xi32>
    %cst_12 = arith.constant 0.000000e+00 : f32
    %41 = vector.broadcast %cst_12 : f32 to vector<8x169xf32>
    %42 = arith.select %40, %21, %41 : vector<8x169xi1>, vector<8x169xf32>
    %cst_13 = arith.constant dense<0.000000e+00> : vector<8xf32>
    %43 = vector.multi_reduction <add>, %42, %cst_13 [1] : vector<8x169xf32> to vector<8xf32>
    %44 = vector.shape_cast %43 : vector<8xf32> to vector<8x1xf32>
    %c0_14 = arith.constant 0 : index
    %c0_15 = arith.constant 0 : index
    %45 = vector.load %arg4[%c0_14, %c0_15] : memref<8x1xf32, #tpu.memory_space<vmem>>, vector<8x1xf32>
    %46 = arith.mulf %20, %44 : vector<8x1xf32>
    %47 = arith.mulf %46, %45 : vector<8x1xf32>
    %48 = vector.shape_cast %47 : vector<8x1xf32> to vector<1x8x1xf32>
    %cst_16 = arith.constant dense<0.000000e+00> : vector<1xf32>
    %49 = vector.multi_reduction <add>, %48, %cst_16 [1, 2] : vector<1x8x1xf32> to vector<1xf32>
    %50 = vector.shape_cast %49 : vector<1xf32> to vector<1x1x1xf32>
    %51 = vector.extract %50[0, 0, 0] : f32 from vector<1x1x1xf32>
    %c0_i32_17 = arith.constant 0 : i32
    %52 = arith.cmpi eq, %arg0, %c0_i32_17 : i32
    %53 = arith.extui %52 : i1 to i32
    %c0_i32_18 = arith.constant 0 : i32
    %54 = arith.cmpi ne, %53, %c0_i32_18 : i32
    scf.if %54 {
      %cst_23 = arith.constant 0.000000e+00 : f32
      %c0_24 = arith.constant 0 : index
      %c0_25 = arith.constant 0 : index
      %58 = memref.load %arg5[%c0_24, %c0_25] : memref<1x1xf32, #tpu.memory_space<smem>>
      memref.store %cst_23, %arg5[%c0_24, %c0_25] : memref<1x1xf32, #tpu.memory_space<smem>>
    } else {
    }
    %c0_19 = arith.constant 0 : index
    %c0_20 = arith.constant 0 : index
    %55 = memref.load %arg5[%c0_19, %c0_20] : memref<1x1xf32, #tpu.memory_space<smem>>
    %56 = arith.addf %55, %51 : f32
    %c0_21 = arith.constant 0 : index
    %c0_22 = arith.constant 0 : index
    %57 = memref.load %arg5[%c0_21, %c0_22] : memref<1x1xf32, #tpu.memory_space<smem>>
    memref.store %56, %arg5[%c0_21, %c0_22] : memref<1x1xf32, #tpu.memory_space<smem>>
    return
  }
  func.func @transform_0(%arg0: i32) -> (i32, i32) {
    %c0_i32 = arith.constant 0 : i32
    %c0_i32_0 = arith.constant 0 : i32
    return %arg0, %c0_i32 : i32, i32
  }
  func.func @transform_1(%arg0: i32) -> (i32, i32) {
    %c0_i32 = arith.constant 0 : i32
    %c0_i32_0 = arith.constant 0 : i32
    return %arg0, %c0_i32 : i32, i32
  }
  func.func @transform_2(%arg0: i32) -> (i32, i32) {
    %c0_i32 = arith.constant 0 : i32
    %c0_i32_0 = arith.constant 0 : i32
    return %arg0, %c0_i32 : i32, i32
  }
  func.func @transform_3(%arg0: i32) -> (i32, i32) {
    %c0_i32 = arith.constant 0 : i32
    %c0_i32_0 = arith.constant 0 : i32
    return %arg0, %c0_i32 : i32, i32
  }
  func.func @transform_4(%arg0: i32) -> (i32, i32) {
    %c0_i32 = arith.constant 0 : i32
    %c0_i32_0 = arith.constant 0 : i32
    %c0_i32_1 = arith.constant 0 : i32
    return %c0_i32, %c0_i32_0 : i32, i32
  }
}

</mosaic_0001>

<llo_original>
// kernel: tpu_custom_call.1
$region0: #{tpu_custom_call.1}
  #allocation0 [shape = 'u32[]', space=smem, size = 0x4, offset = 0x4, fixed_abs, tag = 'smem constant byte address 0x4 - core index']
  #allocation1 [shape = 'u32[72,128]{1,0:T(1,128)}', space=vmem, size = 0x9000, scoped, tag = 'internal scratch']
  %s0 = inlined_call_operand.hbm [shape: f32[8,13], index: 0, kind: input, shape index: {}]
  %s1 = inlined_call_operand.vmem [shape: s32[8,1], index: 1, kind: input, shape index: {}]
  %s2 = inlined_call_operand.vmem [shape: f32[8,169], index: 2, kind: input, shape index: {}]
  %s3 = inlined_call_operand.vmem [shape: f32[8,1], index: 3, kind: input, shape index: {}]
  %s4 = inlined_call_operand.hbm [shape: f32[1,1], index: 4, kind: output, shape index: {}]
  %s5 = sld [smem:[#allocation0]]
  $region34: #{tpu_custom_call.1} parent=0
    _
  %s7 = ssub.s32 1, %s5
  %s8 = scalar_select 0, %s7, %s5
  $region1: #{tpu_custom_call.1} parent=0
    #allocation2 [shape = 'u8[4096]{0}', space=vmem, size = 0x1000, scoped, tag = 'input window, operand 0, single buffered']
    #allocation3 [shape = 's32[1]{0}', space=sflag, size = 0x4, scoped, tag = 'scoped memory for tpu_custom_call.1']
    #allocation4 [shape = 's32[1]{0}', space=sflag, size = 0x4, scoped, tag = 'scoped memory for tpu_custom_call.1']
    #allocation5 [shape = 'u8[512]{0}', space=smem, size = 0x200, scoped, tag = 'output window, operand 0, single buffered']
    %9 = vsyncpa [#allocation3], 0
    %10 = vsyncpa [#allocation4], 0
    // Predicated region
    $region2: #{tpu_custom_call.1} parent=1 // pred_check
      _
    $region3: #{tpu_custom_call.1} parent=1 // pred_check_branch
      %12 = sbr.rel (0) target = $region5
    $region4: #{tpu_custom_call.1} parent=1 // pred_region
      %14 = vsyncadd [#allocation3], 0
      %s16 = sshll.u32 %s0, 4
      %s17 = int_to_ptr.hbm [resolvable:$true] %s16
      %s18 = sshll.u32 [#allocation2], 4
      %s19 = int_to_ptr.vmem [resolvable:$true] %s18
      %21 = dma.hbm_to_vmem [thread:$0]  %s17, 128, %s19, [#allocation3]
    $region5: #{tpu_custom_call.1} parent=1 // pred_fallthru
      _
    // Predicated region
    $region6: #{tpu_custom_call.1} parent=1 // pred_check
      _
    $region7: #{tpu_custom_call.1} parent=1 // pred_check_branch
      %23 = sbr.rel (0) target = $region9
    $region8: #{tpu_custom_call.1} parent=1 // pred_region
      _
    $region9: #{tpu_custom_call.1} parent=1 // pred_fallthru
      _
    // Predicated region
    $region10: #{tpu_custom_call.1} parent=1 // pred_check
      _
    $region11: #{tpu_custom_call.1} parent=1 // pred_check_branch
      %25 = sbr.rel (0) target = $region13
    $region12: #{tpu_custom_call.1} parent=1 // pred_region
      _
    $region13: #{tpu_custom_call.1} parent=1 // pred_fallthru
      _
    // Predicated region
    $region14: #{tpu_custom_call.1} parent=1 // pred_check
      _
    $region15: #{tpu_custom_call.1} parent=1 // pred_check_branch
      %27 = sbr.rel (0) target = $region17
    $region16: #{tpu_custom_call.1} parent=1 // pred_region
      _
    $region17: #{tpu_custom_call.1} parent=1 // pred_fallthru
      _
    // Predicated region
    $region18: #{tpu_custom_call.1} parent=1 // pred_check
      _
    $region19: #{tpu_custom_call.1} parent=1 // pred_check_branch
      %29 = sbr.rel (0) target = $region21
    $region20: #{tpu_custom_call.1} parent=1 // pred_region
      %31 = dma.done [#allocation3], 128
    $region21: #{tpu_custom_call.1} parent=1 // pred_fallthru
      _
    %v32 = vld [vmem:[#allocation2] sm:$0xff]
    %vm33 = vcmask 105472
    %v34 = vsel %vm33, %v32, -inf
    %35 = vmax.xlane.f32.xlu0 %v34
    %v36 = vpop.xlane.xlu0 %35
    %v37 = vsub.f32 %v32, %v36
    %v38 = vmul.f32 %v37, 1.442695
    %v39 = vpow.pop %v38
    %v40 = vsel %vm33, %v39, 0.0
    %41 = vadd.xlane.f32.xlu0 %v40
    %v42 = vpop.xlane.xlu0 %41
    %v43 = vlog2.pop %v42
    %v44 = vmul.f32 %v43, 0.6931472
    %v45 = vsub.f32 %v37, %v44
    %v46 = vld [vmem:[%s1] sm:$0xff]
    %v47 = vlaneseq
    %v48 = vand.u32 %v47, 127
    %49 = vset.pattern.permute.xlu0 0
    %50 = vperm.xlu0 %49, %v46
    %v51 = vpop.permute.xlu0 %50
    %vm52 = vcmp.eq.s32.totalorder %v48, %v51
    %v53 = vsub.f32 0.0, %v45
    %v54 = vsel %vm52, %v53, 0.0
    %v55 = vsel %vm33, %v54, 0.0
    %56 = vadd.xlane.f32.xlu0 %v55
    %v57 = vpop.xlane.xlu0 %56
    %v58 = vld [vmem:[%s2] sm:$0xff]
    %v59 = vld [vmem:[%s2 + $0x8] sm:$0xff]
    %v60 = vadd.s32 %v48, 128
    %vm61 = vcmp.lt.s32.totalorder %v48, 0
    %v62 = vsub.s32 0, %v48
    %v63 = vsel %vm61, %v62, %v48
    %v64 = vand.u32 %v63, 65535
    %v65 = vshrl.u32 %v63, 16
    %v67 = vmul.u32 %v64, 55454
    %v68 = vmul.u32 %v64, 40329
    %v69 = vmul.u32 %v65, 55454
    %v70 = vmul.u32 %v65, 40329
    %v71 = vshll.u32 %v68, 16
    %v72 = vshrl.u32 %v68, 16
    %v73 = vshll.u32 %v69, 16
    %v74 = vshrl.u32 %v69, 16
    %vm75 = vc.u32 %v67, %v71
    %v76 = vsel %vm75, 1, 0
    %v77 = vadd.s32 %v67, %v71
    %v78 = vadd.s32 %v70, %v76
    %vm79 = vc.u32 %v77, %v73
    %v80 = vsel %vm79, 1, 0
    %v81 = vadd.s32 %v77, %v73
    %v82 = vadd.s32 %v78, %v80
    %v83 = vadd.s32 %v82, %v72
    %v84 = vadd.s32 %v83, %v74
    %v85 = vshrl.u32 %v84, 3
    %v86 = vmul.u32 %v85, 13
    %v87 = vsub.s32 %v63, %v86
    %v88 = vsub.s32 0, %v87
    %v89 = vsel %vm61, %v88, %v87
    %vm90 = vcmp.lt.s32.totalorder %v60, 0
    %v91 = vsub.s32 0, %v60
    %v92 = vsel %vm90, %v91, %v60
    %v93 = vand.u32 %v92, 65535
    %v94 = vshrl.u32 %v92, 16
    %v96 = vmul.u32 %v93, 55454
    %v97 = vmul.u32 %v93, 40329
    %v98 = vmul.u32 %v94, 55454
    %v99 = vmul.u32 %v94, 40329
    %v100 = vshll.u32 %v97, 16
    %v101 = vshrl.u32 %v97, 16
    %v102 = vshll.u32 %v98, 16
    %v103 = vshrl.u32 %v98, 16
    %vm104 = vc.u32 %v96, %v100
    %v105 = vsel %vm104, 1, 0
    %v106 = vadd.s32 %v96, %v100
    %v107 = vadd.s32 %v99, %v105
    %vm108 = vc.u32 %v106, %v102
    %v109 = vsel %vm108, 1, 0
    %v110 = vadd.s32 %v106, %v102
    %v111 = vadd.s32 %v107, %v109
    %v112 = vadd.s32 %v111, %v101
    %v113 = vadd.s32 %v112, %v103
    %v114 = vshrl.u32 %v113, 3
    %v115 = vmul.u32 %v114, 13
    %v116 = vsub.s32 %v92, %v115
    %v117 = vsub.s32 0, %v116
    %v118 = vsel %vm90, %v117, %v116
    %vm119 = vcmp.ne.s32.totalorder %v89, 0
    %vm120 = vcmp.ne.s32.totalorder %v118, 0
    %vm121 = vcmp.lt.s32.totalorder %v89, 0
    %vm122 = vcmp.lt.s32.totalorder %v118, 0
    %vm123 = vmand %vm121, %vm119
    %vm124 = vmand %vm122, %vm120
    %v125 = vadd.s32 %v89, 13
    %v126 = vadd.s32 %v118, 13
    %v127 = vsel %vm123, %v125, %v89
    %v128 = vsel %vm124, %v126, %v118
    %vm129 = vcmp.eq.s32.totalorder %v127, %v51
    %vm130 = vcmp.eq.s32.totalorder %v128, %v51
    %v131 = vsel %vm129, %v58, 0.0
    %v132 = vsel %vm130, %v59, 0.0
    %vm133 = vcmask 334848
    %v134 = vsel %vm133, %v132, 0.0
    %v135 = vadd.f32 %v131, %v134
    %136 = vadd.xlane.f32.xlu0 %v135
    %v137 = vpop.xlane.xlu0 %136
    %v138 = vld [vmem:[%s3] sm:$0xff]
    %v139 = vmul.f32 %v57, %v137
    %v140 = vmul.f32 %v139, %v138
    %vm141 = vcmask 7168
    %v142 = vsel %vm141, %v140, 0.0
    %143 = vadd.xlane.f32.xlu0 %v142
    %v144 = vpop.xlane.xlu0 %143
    %v145 = vrot.slane %v144, 4
    %v146 = vadd.f32 %v144, %v145
    %v147 = vrot.slane %v146, 2
    %v148 = vadd.f32 %v146, %v147
    %v149 = vrot.slane %v148, 1
    %v150 = vadd.f32 %v148, %v149
    %s151 = vtos %v150
    %p152 = scmp.eq.s32.totalorder 0, 0
    // Predicated region
    $region22: #{tpu_custom_call.1} parent=1 // pred_check
      %p153 = pneg %p152
    $region23: #{tpu_custom_call.1} parent=1 // pred_check_branch
      %155 = sbr.rel (%p153) target = $region25
    $region24: #{tpu_custom_call.1} parent=1 // pred_region
      %s156 = scalar_lea.smem [#allocation5], 0
      %157 = sst [smem:[%s156]] 0.0
    $region25: #{tpu_custom_call.1} parent=1 // pred_fallthru
      _
    %s158 = sld [smem:[#allocation5]]
    %s159 = sadd.f32 %s158, %s151
    %s160 = scalar_lea.smem [#allocation5], 0
    %161 = sst [smem:[%s160]] %s159
    // Predicated region
    $region26: #{tpu_custom_call.1} parent=1 // pred_check
      _
    $region27: #{tpu_custom_call.1} parent=1 // pred_check_branch
      %163 = sbr.rel (0) target = $region29
    $region28: #{tpu_custom_call.1} parent=1 // pred_region
      %165 = vsyncadd [#allocation4], 0
      %s167 = sshll.u32 %s4, 4
      %s168 = int_to_ptr.hbm [resolvable:$true] %s167
      %170 = dma.smem_to_hbm [#allocation5], 16, %s168, [#allocation4]
    $region29: #{tpu_custom_call.1} parent=1 // pred_fallthru
      _
    // Predicated region
    $region30: #{tpu_custom_call.1} parent=1 // pred_check
      _
    $region31: #{tpu_custom_call.1} parent=1 // pred_check_branch
      %172 = sbr.rel (0) target = $region33
    $region32: #{tpu_custom_call.1} parent=1 // pred_region
      %174 = dma.done [#allocation4], 16
    $region33: #{tpu_custom_call.1} parent=1 // pred_fallthru
      _
    %175 = sfence
    %176 = vsyncpa [#allocation3], 1
    %177 = vsyncpa [#allocation4], 1

</llo_original>
